<compile_context>
chip_gen: v5e
topology: v5e:2x2
jax: 0.10.0
libtpu: 0.0.40
codegen_flags: <defaults>
</compile_context>

<pallas_src>
import functools

import numpy as np
import jax
import jax.numpy as jnp
from jax.experimental import pallas as pl
from jax.experimental.pallas import tpu as pltpu

_LANE = 128


def net_gcn_kernel(x_ref, adj_ref, w1_ref, b1_ref, w2_ref, b2_ref, out_ref,
                   *, mxu_dtype):
    adj = adj_ref[...]                                  # [N, N], mxu_dtype

    def gcn(feat, w, b):
        # out = A_norm @ (feat @ W) + b, reassociated so the NxN aggregation
        # contracts min(Fin, Fout). Shapes are static at trace time.
        fin, fout = w.shape
        if fout <= fin:                                 # project first
            t = jnp.dot(feat.astype(mxu_dtype), w,
                        preferred_element_type=jnp.float32)
            agg = jnp.dot(adj, t.astype(mxu_dtype),
                          preferred_element_type=jnp.float32)
        else:                                           # aggregate first
            t = jnp.dot(adj, feat.astype(mxu_dtype),
                        preferred_element_type=jnp.float32)
            agg = jnp.dot(t.astype(mxu_dtype), w,
                          preferred_element_type=jnp.float32)
        return agg + b                                  # f32

    # conv1 + ReLU (elementwise in f32)
    h = jnp.maximum(gcn(x_ref[...], w1_ref[...], b1_ref[...]), 0.0)

    # F.dropout(h, training=self.training): identity for an inference-mode
    # (module.eval()) forward.
    # TODO(synk): training-mode dropout (p=0.5, scale 1/(1-p)) via
    # pltpu.prng_seed / pltpu.prng_random_bits is not implemented.

    # conv2 over the lane-padded classifier (pad columns: zero weight,
    # -1e30 bias -> exp() == 0, never affects max / logsumexp).
    z = gcn(h, w2_ref[...], b2_ref[...])                # [N, C_pad], f32

    # log_softmax over dim=1 (stable, f32)
    m = jnp.max(z, axis=1, keepdims=True)
    s = z - m
    lse = jnp.log(jnp.sum(jnp.exp(s), axis=1, keepdims=True))
    out_ref[...] = (s - lse).astype(out_ref.dtype)


def net_forward(x, adj_norm, w1, b1, w2, b2, *, mxu_dtype=jnp.bfloat16):
    """Fused forward: GCNConv -> ReLU -> (dropout) -> GCNConv -> log_softmax."""
    f32 = jnp.float32
    N, F = x.shape
    H = w1.shape[1]
    C = w2.shape[1]
    C_pad = ((C + _LANE - 1) // _LANE) * _LANE          # lane-dense output width

    # Lane-dense classifier: zero-pad weights, large-negative-pad bias.
    w2p = jnp.zeros((H, C_pad), f32).at[:, :C].set(w2.astype(f32))
    b2p = jnp.full((1, C_pad), -1e30, f32).at[:, :C].set(b2.reshape(1, C).astype(f32))

    # MXU operands in mxu_dtype (bf16 by default); biases / elementwise stay f32.
    x_m = x.astype(mxu_dtype)
    adj_m = adj_norm.astype(mxu_dtype)
    w1_m = w1.astype(mxu_dtype)
    w2p_m = w2p.astype(mxu_dtype)
    b1_f = b1.reshape(1, H).astype(f32)

    # Fully-VMEM-resident design is dominated by the dense NxN adjacency.
    # v7x has only 64 MiB physical VMEM (32 MiB default scoped), half of
    # v5e/v6e — keep a conservative ceiling here.
    isz = np.dtype(mxu_dtype).itemsize
    resident_bytes = (N * N * isz + N * F * isz + F * H * isz + H * C_pad * isz
                      + N * H * 4 + 2 * N * C_pad * 4 + (H + C_pad) * 4)
    assert resident_bytes < 24 * (1 << 20), (
        "graph too large for the fully-resident kernel; tile adj_norm over "
        "node rows (pl.BlockSpec((tile_n, N), lambda i: (i, 0))) instead")
    # TODO(synk): node-row grid for very large graphs, and a leading per-graph
    # 'parallel' grid axis (to use both v7x TensorCores when batching graphs),
    # are not implemented.

    # Advisory cost so XLA can overlap this tiny, latency-bound custom call.
    macs = (N * F * H + N * N * min(F, H)               # conv1 (reassociated)
            + N * H * C_pad + N * N * min(H, C_pad))    # conv2 (reassociated)
    inputs = (x_m, adj_m, w1_m, b1_f, w2p_m, b2p)
    bytes_accessed = (sum(int(a.size) * a.dtype.itemsize for a in inputs)
                      + N * C_pad * 4)
    cost = pl.CostEstimate(flops=2 * macs + 6 * N * C_pad,
                           transcendentals=N * C_pad + N,
                           bytes_accessed=bytes_accessed)

    vmem = pl.BlockSpec(memory_space=pltpu.MemorySpace.VMEM)
    out_pad = pl.pallas_call(
        functools.partial(net_gcn_kernel, mxu_dtype=mxu_dtype),
        out_shape=jax.ShapeDtypeStruct((N, C_pad), f32),
        in_specs=[vmem] * 6,
        out_specs=vmem,
        cost_estimate=cost,
    )(*inputs)
    return out_pad[:, :C]                               # drop lane padding


def build_gcn_norm_adj(edge_index, num_nodes):
    """Dense D^{-1/2} (A + I) D^{-1/2} matching PyG gcn_norm with unit weights.

    edge_index[0] = source, edge_index[1] = target; A[dst, src] accumulates.
    Duplicate edges scatter-add; existing self-loops are replaced by a single
    unit self-loop per node (add_remaining_self_loops semantics).
    """
    src = edge_index[0]
    dst = edge_index[1]
    w = jnp.where(src == dst, 0.0, 1.0).astype(jnp.float32)
    a = jnp.zeros((num_nodes, num_nodes), jnp.float32).at[dst, src].add(w)
    a = a + jnp.eye(num_nodes, dtype=jnp.float32)
    deg = jnp.sum(a, axis=1)                            # >= 1 (self-loop)
    dinv = jax.lax.rsqrt(deg)
    return dinv[:, None] * a * dinv[None, :]


def reference_forward(x, adj, w1, b1, w2, b2):
    """Pure-JAX f32 reference of the module forward (eval-mode dropout)."""
    h = jnp.maximum(adj @ (x @ w1) + b1, 0.0)
    z = adj @ (h @ w2) + b2
    return jax.nn.log_softmax(z, axis=1)


if __name__ == "__main__":
    key = jax.random.PRNGKey(0)
    # Small deterministic synthetic graph consistent with the module:
    # N nodes, F node features, hidden 16, 11 classes, E edges.
    N, F, H, C, E = 128, 64, 16, 11, 512

    k1, k2, k3, k4, k5 = jax.random.split(key, 5)
    x = jax.random.normal(k1, (N, F), dtype=jnp.float32)
    edge_index = jax.random.randint(k2, (2, E), 0, N, dtype=jnp.int32)
    adj_norm = build_gcn_norm_adj(edge_index, N)

    # GCNConv defaults: glorot-uniform weight, zero bias.
    lim1 = (6.0 / (F + H)) ** 0.5
    w1 = jax.random.uniform(k3, (F, H), jnp.float32, -lim1, lim1)
    b1 = jnp.zeros((1, H), jnp.float32)
    lim2 = (6.0 / (H + C)) ** 0.5
    w2 = jax.random.uniform(k4, (H, C), jnp.float32, -lim2, lim2)
    b2 = jnp.zeros((1, C), jnp.float32)

    ref = reference_forward(x, adj_norm, w1, b1, w2, b2)

    # Exact-math path (f32 MXU operands) must match the reference tightly.
    out_f32 = jax.block_until_ready(
        net_forward(x, adj_norm, w1, b1, w2, b2, mxu_dtype=jnp.float32))
    assert out_f32.shape == (N, C) and out_f32.dtype == jnp.float32
    assert bool(jnp.all(jnp.abs(out_f32 - ref) < 1e-4))

    # Fast path: bf16 MXU operands, f32 accumulation / elementwise.
    out = jax.block_until_ready(net_forward(x, adj_norm, w1, b1, w2, b2))
    assert out.shape == (N, C) and out.dtype == jnp.float32
    assert bool(jnp.all(jnp.abs(out - ref) < 1e-1))

    # Rows of log_softmax must exponentiate-sum to 1.
    row_sums = jnp.exp(out).sum(axis=1)
    assert bool(jnp.all(jnp.abs(row_sums - 1.0) < 1e-4))

    print("KERNEL_OK")
</pallas_src>

<mosaic_0001>
module attributes {stable_mosaic.version = 11 : i64} {
  func.func @net_gcn_kernel(%arg0: memref<128x64xf32, #tpu.memory_space<vmem>>, %arg1: memref<128x128xf32, #tpu.memory_space<vmem>>, %arg2: memref<64x16xf32, #tpu.memory_space<vmem>>, %arg3: memref<1x16xf32, #tpu.memory_space<vmem>>, %arg4: memref<16x128xf32, #tpu.memory_space<vmem>>, %arg5: memref<1x128xf32, #tpu.memory_space<vmem>>, %arg6: memref<128x128xf32, #tpu.memory_space<vmem>>) attributes {dimension_semantics = [], scalar_prefetch = 0 : i64, scratch_operands = 0 : i64, tpu.core_type = #tpu.core_type<tc>} {
    %c0 = arith.constant 0 : index
    %c0_0 = arith.constant 0 : index
    %0 = vector.load %arg1[%c0, %c0_0] : memref<128x128xf32, #tpu.memory_space<vmem>>, vector<128x128xf32>
    %c0_1 = arith.constant 0 : index
    %c0_2 = arith.constant 0 : index
    %1 = vector.load %arg0[%c0_1, %c0_2] : memref<128x64xf32, #tpu.memory_space<vmem>>, vector<128x64xf32>
    %c0_3 = arith.constant 0 : index
    %c0_4 = arith.constant 0 : index
    %2 = vector.load %arg2[%c0_3, %c0_4] : memref<64x16xf32, #tpu.memory_space<vmem>>, vector<64x16xf32>
    %c0_5 = arith.constant 0 : index
    %c0_6 = arith.constant 0 : index
    %3 = vector.load %arg3[%c0_5, %c0_6] : memref<1x16xf32, #tpu.memory_space<vmem>>, vector<1x16xf32>
    %cst = arith.constant dense<0.000000e+00> : vector<128x16xf32>
    %4 = tpu.matmul %1, %2, %cst {dimension_numbers = #tpu.dot_dimension_numbers<[1], [0], [0], [1], [0, 0, 1, 1], [], []>} : vector<128x64xf32>, vector<64x16xf32>, vector<128x16xf32> -> vector<128x16xf32>
    %cst_7 = arith.constant dense<0.000000e+00> : vector<128x16xf32>
    %5 = tpu.matmul %0, %4, %cst_7 {dimension_numbers = #tpu.dot_dimension_numbers<[1], [0], [0], [1], [0, 0, 1, 1], [], []>} : vector<128x128xf32>, vector<128x16xf32>, vector<128x16xf32> -> vector<128x16xf32>
    %6 = vector.broadcast %3 : vector<1x16xf32> to vector<128x16xf32>
    %7 = arith.addf %5, %6 : vector<128x16xf32>
    %cst_8 = arith.constant 0.000000e+00 : f32
    %8 = vector.broadcast %cst_8 : f32 to vector<128x16xf32>
    %9 = arith.maximumf %7, %8 : vector<128x16xf32>
    %c0_9 = arith.constant 0 : index
    %c0_10 = arith.constant 0 : index
    %10 = vector.load %arg4[%c0_9, %c0_10] : memref<16x128xf32, #tpu.memory_space<vmem>>, vector<16x128xf32>
    %c0_11 = arith.constant 0 : index
    %c0_12 = arith.constant 0 : index
    %11 = vector.load %arg5[%c0_11, %c0_12] : memref<1x128xf32, #tpu.memory_space<vmem>>, vector<1x128xf32>
    %cst_13 = arith.constant dense<0.000000e+00> : vector<128x16xf32>
    %12 = tpu.matmul %0, %9, %cst_13 {dimension_numbers = #tpu.dot_dimension_numbers<[1], [0], [0], [1], [0, 0, 1, 1], [], []>} : vector<128x128xf32>, vector<128x16xf32>, vector<128x16xf32> -> vector<128x16xf32>
    %cst_14 = arith.constant dense<0.000000e+00> : vector<128x128xf32>
    %13 = tpu.matmul %12, %10, %cst_14 {dimension_numbers = #tpu.dot_dimension_numbers<[1], [0], [0], [1], [0, 0, 1, 1], [], []>} : vector<128x16xf32>, vector<16x128xf32>, vector<128x128xf32> -> vector<128x128xf32>
    %14 = vector.broadcast %11 : vector<1x128xf32> to vector<128x128xf32>
    %15 = arith.addf %13, %14 : vector<128x128xf32>
    %cst_15 = arith.constant dense<0xFF800000> : vector<128xf32>
    %16 = vector.multi_reduction <maximumf>, %15, %cst_15 [1] : vector<128x128xf32> to vector<128xf32>
    %17 = vector.shape_cast %16 : vector<128xf32> to vector<128x1xf32>
    %18 = vector.broadcast %17 : vector<128x1xf32> to vector<128x128xf32>
    %19 = arith.subf %15, %18 : vector<128x128xf32>
    %20 = math.exp %19 : vector<128x128xf32>
    %cst_16 = arith.constant dense<0.000000e+00> : vector<128xf32>
    %21 = vector.multi_reduction <add>, %20, %cst_16 [1] : vector<128x128xf32> to vector<128xf32>
    %22 = vector.shape_cast %21 : vector<128xf32> to vector<128x1xf32>
    %23 = math.log %22 : vector<128x1xf32>
    %24 = vector.broadcast %23 : vector<128x1xf32> to vector<128x128xf32>
    %25 = arith.subf %19, %24 : vector<128x128xf32>
    %c0_17 = arith.constant 0 : index
    %c0_18 = arith.constant 0 : index
    %26 = vector.load %arg6[%c0_17, %c0_18] : memref<128x128xf32, #tpu.memory_space<vmem>>, vector<128x128xf32>
    tpu.vector_store %arg6[%c0_17, %c0_18], %25 {strides = array<i32>} : memref<128x128xf32, #tpu.memory_space<vmem>>, vector<128x128xf32>,
    return
  }
}

</mosaic_0001>

<llo_original>
// kernel: tpu_custom_call.1
$region0: #{tpu_custom_call.1}
  #allocation0 [shape = 'u32[]', space=smem, size = 0x4, offset = 0x4, fixed_abs, tag = 'smem constant byte address 0x4 - core index']
  #allocation1 [shape = 'u32[72,128]{1,0:T(1,128)}', space=vmem, size = 0x9000, scoped, tag = 'internal scratch']
  %s0 = inlined_call_operand.vmem [shape: f32[128,64], index: 0, kind: input, shape index: {}]
  %s1 = inlined_call_operand.vmem [shape: f32[128,128], index: 1, kind: input, shape index: {}]
  %s2 = inlined_call_operand.vmem [shape: f32[64,16], index: 2, kind: input, shape index: {}]
  %s3 = inlined_call_operand.vmem [shape: f32[1,16], index: 3, kind: input, shape index: {}]
  %s4 = inlined_call_operand.vmem [shape: f32[16,128], index: 4, kind: input, shape index: {}]
  %s5 = inlined_call_operand.vmem [shape: f32[1,128], index: 5, kind: input, shape index: {}]
  %s6 = inlined_call_operand.hbm [shape: f32[128,128], index: 6, kind: output, shape index: {}]
  %s7 = sld [smem:[#allocation0]]
  $region34: #{tpu_custom_call.1} parent=0
    _
  %s9 = ssub.s32 1, %s7
  %s10 = scalar_select 0, %s9, %s7
  $region1: #{tpu_custom_call.1} parent=0
    #allocation2 [shape = 'u8[65536]{0}', space=vmem, size = 0x10000, scoped, tag = 'output window, operand 0, single buffered']
    #allocation3 [shape = 's32[1]{0}', space=sflag, size = 0x4, scoped, tag = 'scoped memory for tpu_custom_call.1']
    %11 = vsyncpa [#allocation3], 0
    // Predicated region
    $region2: #{tpu_custom_call.1} parent=1 // pred_check
      _
    $region3: #{tpu_custom_call.1} parent=1 // pred_check_branch
      %13 = sbr.rel (0) target = $region5
    $region4: #{tpu_custom_call.1} parent=1 // pred_region
      _
    $region5: #{tpu_custom_call.1} parent=1 // pred_fallthru
      _
    // Predicated region
    $region6: #{tpu_custom_call.1} parent=1 // pred_check
      _
    $region7: #{tpu_custom_call.1} parent=1 // pred_check_branch
      %15 = sbr.rel (0) target = $region9
    $region8: #{tpu_custom_call.1} parent=1 // pred_region
      _
    $region9: #{tpu_custom_call.1} parent=1 // pred_fallthru
      _
    // Predicated region
    $region10: #{tpu_custom_call.1} parent=1 // pred_check
      _
    $region11: #{tpu_custom_call.1} parent=1 // pred_check_branch
      %17 = sbr.rel (0) target = $region13
    $region12: #{tpu_custom_call.1} parent=1 // pred_region
      _
    $region13: #{tpu_custom_call.1} parent=1 // pred_fallthru
      _
    // Predicated region
    $region14: #{tpu_custom_call.1} parent=1 // pred_check
      _
    $region15: #{tpu_custom_call.1} parent=1 // pred_check_branch
      %19 = sbr.rel (0) target = $region17
    $region16: #{tpu_custom_call.1} parent=1 // pred_region
      _
    $region17: #{tpu_custom_call.1} parent=1 // pred_fallthru
      _
    // Predicated region
    $region18: #{tpu_custom_call.1} parent=1 // pred_check
      _
    $region19: #{tpu_custom_call.1} parent=1 // pred_check_branch
      %21 = sbr.rel (0) target = $region21
    $region20: #{tpu_custom_call.1} parent=1 // pred_region
      _
    $region21: #{tpu_custom_call.1} parent=1 // pred_fallthru
      _
    // Predicated region
    $region22: #{tpu_custom_call.1} parent=1 // pred_check
      _
    $region23: #{tpu_custom_call.1} parent=1 // pred_check_branch
      %23 = sbr.rel (0) target = $region25
    $region24: #{tpu_custom_call.1} parent=1 // pred_region
      _
    $region25: #{tpu_custom_call.1} parent=1 // pred_fallthru
      _
    %v24 = vld [vmem:[%s1] sm:$0xff]
    %v25 = vld [vmem:[%s1 + $0x8] sm:$0xff]
    %v26 = vld [vmem:[%s1 + $0x10] sm:$0xff]
    %v27 = vld [vmem:[%s1 + $0x18] sm:$0xff]
    %v28 = vld [vmem:[%s1 + $0x20] sm:$0xff]
    %v29 = vld [vmem:[%s1 + $0x28] sm:$0xff]
    %v30 = vld [vmem:[%s1 + $0x30] sm:$0xff]
    %v31 = vld [vmem:[%s1 + $0x38] sm:$0xff]
    %v32 = vld [vmem:[%s1 + $0x40] sm:$0xff]
    %v33 = vld [vmem:[%s1 + $0x48] sm:$0xff]
    %v34 = vld [vmem:[%s1 + $0x50] sm:$0xff]
    %v35 = vld [vmem:[%s1 + $0x58] sm:$0xff]
    %v36 = vld [vmem:[%s1 + $0x60] sm:$0xff]
    %v37 = vld [vmem:[%s1 + $0x68] sm:$0xff]
    %v38 = vld [vmem:[%s1 + $0x70] sm:$0xff]
    %v39 = vld [vmem:[%s1 + $0x78] sm:$0xff]
    %v40 = vld [vmem:[%s0] sm:$0xff]
    %v41 = vld [vmem:[%s0 + $0x8] sm:$0xff]
    %v42 = vld [vmem:[%s0 + $0x10] sm:$0xff]
    %v43 = vld [vmem:[%s0 + $0x18] sm:$0xff]
    %v44 = vld [vmem:[%s0 + $0x20] sm:$0xff]
    %v45 = vld [vmem:[%s0 + $0x28] sm:$0xff]
    %v46 = vld [vmem:[%s0 + $0x30] sm:$0xff]
    %v47 = vld [vmem:[%s0 + $0x38] sm:$0xff]
    %v48 = vld [vmem:[%s0 + $0x40] sm:$0xff]
    %v49 = vld [vmem:[%s0 + $0x48] sm:$0xff]
    %v50 = vld [vmem:[%s0 + $0x50] sm:$0xff]
    %v51 = vld [vmem:[%s0 + $0x58] sm:$0xff]
    %v52 = vld [vmem:[%s0 + $0x60] sm:$0xff]
    %v53 = vld [vmem:[%s0 + $0x68] sm:$0xff]
    %v54 = vld [vmem:[%s0 + $0x70] sm:$0xff]
    %v55 = vld [vmem:[%s0 + $0x78] sm:$0xff]
    %v56 = vld [vmem:[%s2] sm:$0xff]
    %v57 = vld [vmem:[%s2 + $0x8] sm:$0xff]
    %v58 = vld [vmem:[%s2 + $0x10] sm:$0xff]
    %v59 = vld [vmem:[%s2 + $0x18] sm:$0xff]
    %v60 = vld [vmem:[%s2 + $0x20] sm:$0xff]
    %v61 = vld [vmem:[%s2 + $0x28] sm:$0xff]
    %v62 = vld [vmem:[%s2 + $0x30] sm:$0xff]
    %v63 = vld [vmem:[%s2 + $0x38] sm:$0xff]
    %v64 = vld [vmem:[%s3] sm:$0x1]
    %vm65 = vcmask 523264
    %v67 = vsel %vm65, %v40, 0
    %v70 = vsel %vm65, %v41, 0
    %v73 = vsel %vm65, %v42, 0
    %v76 = vsel %vm65, %v43, 0
    %v79 = vsel %vm65, %v44, 0
    %v82 = vsel %vm65, %v45, 0
    %v85 = vsel %vm65, %v46, 0
    %v88 = vsel %vm65, %v47, 0
    %v91 = vsel %vm65, %v48, 0
    %v94 = vsel %vm65, %v49, 0
    %v97 = vsel %vm65, %v50, 0
    %v100 = vsel %vm65, %v51, 0
    %v103 = vsel %vm65, %v52, 0
    %v106 = vsel %vm65, %v53, 0
    %v109 = vsel %vm65, %v54, 0
    %v112 = vsel %vm65, %v55, 0
    %114 = vmatpush.msra.mxu0 0.0
    %115 = vmatpush.msra.mxu0 0.0
    %116 = vmatpush.msra.mxu0 0.0
    %117 = vmatpush.msra.mxu0 0.0
    %118 = vmatpush.msra.mxu0 0.0
    %119 = vmatpush.msra.mxu0 0.0
    %120 = vmatpush.msra.mxu0 0.0
    %121 = vmatpush.msra.mxu0 0.0
    %122 = vmatpush.msra.mxu0 %v63
    %123 = vmatpush.msra.mxu0 %v62
    %124 = vmatpush.msra.mxu0 %v61
    %125 = vmatpush.msra.mxu0 %v60
    %126 = vmatpush.msra.mxu0 %v59
    %127 = vmatpush.msra.mxu0 %v58
    %128 = vmatpush.msra.mxu0 %v57
    %129 = vmatpush.msra.mxu0 %v56
    %130 = vmatmul.f32.gmra.mxu0 %v67
    %v131 = vpop.f32.mrf.mxu0
    %v132 = vadd.f32 0.0, %v131
    %133 = vmatmul.f32.gmra.mxu0 %v70
    %v134 = vpop.f32.mrf.mxu0
    %v135 = vadd.f32 0.0, %v134
    %136 = vmatmul.f32.gmra.mxu0 %v73
    %v137 = vpop.f32.mrf.mxu0
    %v138 = vadd.f32 0.0, %v137
    %139 = vmatmul.f32.gmra.mxu0 %v76
    %v140 = vpop.f32.mrf.mxu0
    %v141 = vadd.f32 0.0, %v140
    %142 = vmatmul.f32.gmra.mxu0 %v79
    %v143 = vpop.f32.mrf.mxu0
    %v144 = vadd.f32 0.0, %v143
    %145 = vmatmul.f32.gmra.mxu0 %v82
    %v146 = vpop.f32.mrf.mxu0
    %v147 = vadd.f32 0.0, %v146
    %148 = vmatmul.f32.gmra.mxu0 %v85
    %v149 = vpop.f32.mrf.mxu0
    %v150 = vadd.f32 0.0, %v149
    %151 = vmatmul.f32.gmra.mxu0 %v88
    %v152 = vpop.f32.mrf.mxu0
    %v153 = vadd.f32 0.0, %v152
    %154 = vmatmul.f32.gmra.mxu0 %v91
    %v155 = vpop.f32.mrf.mxu0
    %v156 = vadd.f32 0.0, %v155
    %157 = vmatmul.f32.gmra.mxu0 %v94
    %v158 = vpop.f32.mrf.mxu0
    %v159 = vadd.f32 0.0, %v158
    %160 = vmatmul.f32.gmra.mxu0 %v97
    %v161 = vpop.f32.mrf.mxu0
    %v162 = vadd.f32 0.0, %v161
    %163 = vmatmul.f32.gmra.mxu0 %v100
    %v164 = vpop.f32.mrf.mxu0
    %v165 = vadd.f32 0.0, %v164
    %166 = vmatmul.f32.gmra.mxu0 %v103
    %v167 = vpop.f32.mrf.mxu0
    %v168 = vadd.f32 0.0, %v167
    %169 = vmatmul.f32.gmra.mxu0 %v106
    %v170 = vpop.f32.mrf.mxu0
    %v171 = vadd.f32 0.0, %v170
    %172 = vmatmul.f32.gmra.mxu0 %v109
    %v173 = vpop.f32.mrf.mxu0
    %v174 = vadd.f32 0.0, %v173
    %175 = vmatmul.f32.gmra.mxu0 %v112
    %v176 = vpop.f32.mrf.mxu0
    %v177 = vadd.f32 0.0, %v176
    %178 = vdwg.mxu0
    %v180 = vperm.slane %v64, 0
    %182 = vmatpush.msra.mxu0 %v177
    %183 = vmatpush.msra.mxu0 %v174
    %184 = vmatpush.msra.mxu0 %v171
    %185 = vmatpush.msra.mxu0 %v168
    %186 = vmatpush.msra.mxu0 %v165
    %187 = vmatpush.msra.mxu0 %v162
    %188 = vmatpush.msra.mxu0 %v159
    %189 = vmatpush.msra.mxu0 %v156
    %190 = vmatpush.msra.mxu0 %v153
    %191 = vmatpush.msra.mxu0 %v150
    %192 = vmatpush.msra.mxu0 %v147
    %193 = vmatpush.msra.mxu0 %v144
    %194 = vmatpush.msra.mxu0 %v141
    %195 = vmatpush.msra.mxu0 %v138
    %196 = vmatpush.msra.mxu0 %v135
    %197 = vmatpush.msra.mxu0 %v132
    %198 = vmatmul.f32.gmra.mxu0 %v24
    %v199 = vpop.f32.mrf.mxu0
    %v200 = vadd.f32 %v180, %v199
    %201 = vmatmul.f32.gmra.mxu0 %v25
    %v202 = vpop.f32.mrf.mxu0
    %v203 = vadd.f32 %v180, %v202
    %204 = vmatmul.f32.gmra.mxu0 %v26
    %v205 = vpop.f32.mrf.mxu0
    %v206 = vadd.f32 %v180, %v205
    %207 = vmatmul.f32.gmra.mxu0 %v27
    %v208 = vpop.f32.mrf.mxu0
    %v209 = vadd.f32 %v180, %v208
    %210 = vmatmul.f32.gmra.mxu0 %v28
    %v211 = vpop.f32.mrf.mxu0
    %v212 = vadd.f32 %v180, %v211
    %213 = vmatmul.f32.gmra.mxu0 %v29
    %v214 = vpop.f32.mrf.mxu0
    %v215 = vadd.f32 %v180, %v214
    %216 = vmatmul.f32.gmra.mxu0 %v30
    %v217 = vpop.f32.mrf.mxu0
    %v218 = vadd.f32 %v180, %v217
    %219 = vmatmul.f32.gmra.mxu0 %v31
    %v220 = vpop.f32.mrf.mxu0
    %v221 = vadd.f32 %v180, %v220
    %222 = vmatmul.f32.gmra.mxu0 %v32
    %v223 = vpop.f32.mrf.mxu0
    %v224 = vadd.f32 %v180, %v223
    %225 = vmatmul.f32.gmra.mxu0 %v33
    %v226 = vpop.f32.mrf.mxu0
    %v227 = vadd.f32 %v180, %v226
    %228 = vmatmul.f32.gmra.mxu0 %v34
    %v229 = vpop.f32.mrf.mxu0
    %v230 = vadd.f32 %v180, %v229
    %231 = vmatmul.f32.gmra.mxu0 %v35
    %v232 = vpop.f32.mrf.mxu0
    %v233 = vadd.f32 %v180, %v232
    %234 = vmatmul.f32.gmra.mxu0 %v36
    %v235 = vpop.f32.mrf.mxu0
    %v236 = vadd.f32 %v180, %v235
    %237 = vmatmul.f32.gmra.mxu0 %v37
    %v238 = vpop.f32.mrf.mxu0
    %v239 = vadd.f32 %v180, %v238
    %240 = vmatmul.f32.gmra.mxu0 %v38
    %v241 = vpop.f32.mrf.mxu0
    %v242 = vadd.f32 %v180, %v241
    %243 = vmatmul.f32.gmra.mxu0 %v39
    %v244 = vpop.f32.mrf.mxu0
    %v245 = vadd.f32 %v180, %v244
    %246 = vdwg.mxu0
    %v247 = vmax.f32 %v200, 0.0
    %v248 = vmax.f32 %v203, 0.0
    %v249 = vmax.f32 %v206, 0.0
    %v250 = vmax.f32 %v209, 0.0
    %v251 = vmax.f32 %v212, 0.0
    %v252 = vmax.f32 %v215, 0.0
    %v253 = vmax.f32 %v218, 0.0
    %v254 = vmax.f32 %v221, 0.0
    %v255 = vmax.f32 %v224, 0.0
    %v256 = vmax.f32 %v227, 0.0
    %v257 = vmax.f32 %v230, 0.0
    %v258 = vmax.f32 %v233, 0.0
    %v259 = vmax.f32 %v236, 0.0
    %v260 = vmax.f32 %v239, 0.0
    %v261 = vmax.f32 %v242, 0.0
    %v262 = vmax.f32 %v245, 0.0
    %v263 = vld [vmem:[%s4] sm:$0xff]
    %v264 = vld [vmem:[%s4 + $0x8] sm:$0xff]
    %v265 = vld [vmem:[%s5] sm:$0x1]
    %266 = vmatpush.msra.mxu0 %v262
    %267 = vmatpush.msra.mxu0 %v261
    %268 = vmatpush.msra.mxu0 %v260
    %269 = vmatpush.msra.mxu0 %v259
    %270 = vmatpush.msra.mxu0 %v258
    %271 = vmatpush.msra.mxu0 %v257
    %272 = vmatpush.msra.mxu0 %v256
    %273 = vmatpush.msra.mxu0 %v255
    %274 = vmatpush.msra.mxu0 %v254
    %275 = vmatpush.msra.mxu0 %v253
    %276 = vmatpush.msra.mxu0 %v252
    %277 = vmatpush.msra.mxu0 %v251
    %278 = vmatpush.msra.mxu0 %v250
    %279 = vmatpush.msra.mxu0 %v249
    %280 = vmatpush.msra.mxu0 %v248
    %281 = vmatpush.msra.mxu0 %v247
    %282 = vmatmul.f32.gmra.mxu0 %v24
    %v283 = vpop.f32.mrf.mxu0
    %v284 = vadd.f32 0.0, %v283
    %285 = vmatmul.f32.gmra.mxu0 %v25
    %v286 = vpop.f32.mrf.mxu0
    %v287 = vadd.f32 0.0, %v286
    %288 = vmatmul.f32.gmra.mxu0 %v26
    %v289 = vpop.f32.mrf.mxu0
    %v290 = vadd.f32 0.0, %v289
    %291 = vmatmul.f32.gmra.mxu0 %v27
    %v292 = vpop.f32.mrf.mxu0
    %v293 = vadd.f32 0.0, %v292
    %294 = vmatmul.f32.gmra.mxu0 %v28
    %v295 = vpop.f32.mrf.mxu0
    %v296 = vadd.f32 0.0, %v295
    %297 = vmatmul.f32.gmra.mxu0 %v29
    %v298 = vpop.f32.mrf.mxu0
    %v299 = vadd.f32 0.0, %v298
    %300 = vmatmul.f32.gmra.mxu0 %v30
    %v301 = vpop.f32.mrf.mxu0
    %v302 = vadd.f32 0.0, %v301
    %303 = vmatmul.f32.gmra.mxu0 %v31
    %v304 = vpop.f32.mrf.mxu0
    %v305 = vadd.f32 0.0, %v304
    %306 = vmatmul.f32.gmra.mxu0 %v32
    %v307 = vpop.f32.mrf.mxu0
    %v308 = vadd.f32 0.0, %v307
    %309 = vmatmul.f32.gmra.mxu0 %v33
    %v310 = vpop.f32.mrf.mxu0
    %v311 = vadd.f32 0.0, %v310
    %312 = vmatmul.f32.gmra.mxu0 %v34
    %v313 = vpop.f32.mrf.mxu0
    %v314 = vadd.f32 0.0, %v313
    %315 = vmatmul.f32.gmra.mxu0 %v35
    %v316 = vpop.f32.mrf.mxu0
    %v317 = vadd.f32 0.0, %v316
    %318 = vmatmul.f32.gmra.mxu0 %v36
    %v319 = vpop.f32.mrf.mxu0
    %v320 = vadd.f32 0.0, %v319
    %321 = vmatmul.f32.gmra.mxu0 %v37
    %v322 = vpop.f32.mrf.mxu0
    %v323 = vadd.f32 0.0, %v322
    %324 = vmatmul.f32.gmra.mxu0 %v38
    %v325 = vpop.f32.mrf.mxu0
    %v326 = vadd.f32 0.0, %v325
    %327 = vmatmul.f32.gmra.mxu0 %v39
    %v328 = vpop.f32.mrf.mxu0
    %v329 = vadd.f32 0.0, %v328
    %330 = vdwg.mxu0
    %v332 = vperm.slane %v265, 0
    %vm334 = vcmask 130048
    %v336 = vsel %vm334, %v284, 0
    %v339 = vsel %vm334, %v287, 0
    %v342 = vsel %vm334, %v290, 0
    %v345 = vsel %vm334, %v293, 0
    %v348 = vsel %vm334, %v296, 0
    %v351 = vsel %vm334, %v299, 0
    %v354 = vsel %vm334, %v302, 0
    %v357 = vsel %vm334, %v305, 0
    %v360 = vsel %vm334, %v308, 0
    %v363 = vsel %vm334, %v311, 0
    %v366 = vsel %vm334, %v314, 0
    %v369 = vsel %vm334, %v317, 0
    %v372 = vsel %vm334, %v320, 0
    %v375 = vsel %vm334, %v323, 0
    %v378 = vsel %vm334, %v326, 0
    %v381 = vsel %vm334, %v329, 0
    %383 = vmatpush.msra.mxu0 0.0
    %384 = vmatpush.msra.mxu0 0.0
    %385 = vmatpush.msra.mxu0 0.0
    %386 = vmatpush.msra.mxu0 0.0
    %387 = vmatpush.msra.mxu0 0.0
    %388 = vmatpush.msra.mxu0 0.0
    %389 = vmatpush.msra.mxu0 0.0
    %390 = vmatpush.msra.mxu0 0.0
    %391 = vmatpush.msra.mxu0 0.0
    %392 = vmatpush.msra.mxu0 0.0
    %393 = vmatpush.msra.mxu0 0.0
    %394 = vmatpush.msra.mxu0 0.0
    %395 = vmatpush.msra.mxu0 0.0
    %396 = vmatpush.msra.mxu0 0.0
    %397 = vmatpush.msra.mxu0 %v264
    %398 = vmatpush.msra.mxu0 %v263
    %399 = vmatmul.f32.gmra.mxu0 %v336
    %v400 = vpop.f32.mrf.mxu0
    %v401 = vadd.f32 %v332, %v400
    %402 = vmatmul.f32.gmra.mxu0 %v339
    %v403 = vpop.f32.mrf.mxu0
    %v404 = vadd.f32 %v332, %v403
    %405 = vmatmul.f32.gmra.mxu0 %v342
    %v406 = vpop.f32.mrf.mxu0
    %v407 = vadd.f32 %v332, %v406
    %408 = vmatmul.f32.gmra.mxu0 %v345
    %v409 = vpop.f32.mrf.mxu0
    %v410 = vadd.f32 %v332, %v409
    %411 = vmatmul.f32.gmra.mxu0 %v348
    %v412 = vpop.f32.mrf.mxu0
    %v413 = vadd.f32 %v332, %v412
    %414 = vmatmul.f32.gmra.mxu0 %v351
    %v415 = vpop.f32.mrf.mxu0
    %v416 = vadd.f32 %v332, %v415
    %417 = vmatmul.f32.gmra.mxu0 %v354
    %v418 = vpop.f32.mrf.mxu0
    %v419 = vadd.f32 %v332, %v418
    %420 = vmatmul.f32.gmra.mxu0 %v357
    %v421 = vpop.f32.mrf.mxu0
    %v422 = vadd.f32 %v332, %v421
    %423 = vmatmul.f32.gmra.mxu0 %v360
    %v424 = vpop.f32.mrf.mxu0
    %v425 = vadd.f32 %v332, %v424
    %426 = vmatmul.f32.gmra.mxu0 %v363
    %v427 = vpop.f32.mrf.mxu0
    %v428 = vadd.f32 %v332, %v427
    %429 = vmatmul.f32.gmra.mxu0 %v366
    %v430 = vpop.f32.mrf.mxu0
    %v431 = vadd.f32 %v332, %v430
    %432 = vmatmul.f32.gmra.mxu0 %v369
    %v433 = vpop.f32.mrf.mxu0
    %v434 = vadd.f32 %v332, %v433
    %435 = vmatmul.f32.gmra.mxu0 %v372
    %v436 = vpop.f32.mrf.mxu0
    %v437 = vadd.f32 %v332, %v436
    %438 = vmatmul.f32.gmra.mxu0 %v375
    %v439 = vpop.f32.mrf.mxu0
    %v440 = vadd.f32 %v332, %v439
    %441 = vmatmul.f32.gmra.mxu0 %v378
    %v442 = vpop.f32.mrf.mxu0
    %v443 = vadd.f32 %v332, %v442
    %444 = vmatmul.f32.gmra.mxu0 %v381
    %v445 = vpop.f32.mrf.mxu0
    %v446 = vadd.f32 %v332, %v445
    %447 = vdwg.mxu0
    %448 = vmax.xlane.f32.xlu0 %v401
    %v449 = vpop.xlane.xlu0 %448
    %450 = vmax.xlane.f32.xlu0 %v404
    %v451 = vpop.xlane.xlu0 %450
    %452 = vmax.xlane.f32.xlu0 %v407
    %v453 = vpop.xlane.xlu0 %452
    %454 = vmax.xlane.f32.xlu0 %v410
    %v455 = vpop.xlane.xlu0 %454
    %456 = vmax.xlane.f32.xlu0 %v413
    %v457 = vpop.xlane.xlu0 %456
    %458 = vmax.xlane.f32.xlu0 %v416
    %v459 = vpop.xlane.xlu0 %458
    %460 = vmax.xlane.f32.xlu0 %v419
    %v461 = vpop.xlane.xlu0 %460
    %462 = vmax.xlane.f32.xlu0 %v422
    %v463 = vpop.xlane.xlu0 %462
    %464 = vmax.xlane.f32.xlu0 %v425
    %v465 = vpop.xlane.xlu0 %464
    %466 = vmax.xlane.f32.xlu0 %v428
    %v467 = vpop.xlane.xlu0 %466
    %468 = vmax.xlane.f32.xlu0 %v431
    %v469 = vpop.xlane.xlu0 %468
    %470 = vmax.xlane.f32.xlu0 %v434
    %v471 = vpop.xlane.xlu0 %470
    %472 = vmax.xlane.f32.xlu0 %v437
    %v473 = vpop.xlane.xlu0 %472
    %474 = vmax.xlane.f32.xlu0 %v440
    %v475 = vpop.xlane.xlu0 %474
    %476 = vmax.xlane.f32.xlu0 %v443
    %v477 = vpop.xlane.xlu0 %476
    %478 = vmax.xlane.f32.xlu0 %v446
    %v479 = vpop.xlane.xlu0 %478
    %v480 = vsub.f32 %v401, %v449
    %v481 = vsub.f32 %v404, %v451
    %v482 = vsub.f32 %v407, %v453
    %v483 = vsub.f32 %v410, %v455
    %v484 = vsub.f32 %v413, %v457
    %v485 = vsub.f32 %v416, %v459
    %v486 = vsub.f32 %v419, %v461
    %v487 = vsub.f32 %v422, %v463
    %v488 = vsub.f32 %v425, %v465
    %v489 = vsub.f32 %v428, %v467
    %v490 = vsub.f32 %v431, %v469
    %v491 = vsub.f32 %v434, %v471
    %v492 = vsub.f32 %v437, %v473
    %v493 = vsub.f32 %v440, %v475
    %v494 = vsub.f32 %v443, %v477
    %v495 = vsub.f32 %v446, %v479
    %v496 = vmul.f32 %v480, 1.442695
    %v497 = vpow.pop %v496
    %v498 = vmul.f32 %v481, 1.442695
    %v499 = vpow.pop %v498
    %v500 = vmul.f32 %v482, 1.442695
    %v501 = vpow.pop %v500
    %v502 = vmul.f32 %v483, 1.442695
    %v503 = vpow.pop %v502
    %v504 = vmul.f32 %v484, 1.442695
    %v505 = vpow.pop %v504
    %v506 = vmul.f32 %v485, 1.442695
    %v507 = vpow.pop %v506
    %v508 = vmul.f32 %v486, 1.442695
    %v509 = vpow.pop %v508
    %v510 = vmul.f32 %v487, 1.442695
    %v511 = vpow.pop %v510
    %v512 = vmul.f32 %v488, 1.442695
    %v513 = vpow.pop %v512
    %v514 = vmul.f32 %v489, 1.442695
    %v515 = vpow.pop %v514
    %v516 = vmul.f32 %v490, 1.442695
    %v517 = vpow.pop %v516
    %v518 = vmul.f32 %v491, 1.442695
    %v519 = vpow.pop %v518
    %v520 = vmul.f32 %v492, 1.442695
    %v521 = vpow.pop %v520
    %v522 = vmul.f32 %v493, 1.442695
    %v523 = vpow.pop %v522
    %v524 = vmul.f32 %v494, 1.442695
    %v525 = vpow.pop %v524
    %v526 = vmul.f32 %v495, 1.442695
    %v527 = vpow.pop %v526
    %528 = vadd.xlane.f32.xlu0 %v497
    %v529 = vpop.xlane.xlu0 %528
    %530 = vadd.xlane.f32.xlu0 %v499
    %v531 = vpop.xlane.xlu0 %530
    %532 = vadd.xlane.f32.xlu0 %v501
    %v533 = vpop.xlane.xlu0 %532
    %534 = vadd.xlane.f32.xlu0 %v503
    %v535 = vpop.xlane.xlu0 %534
    %536 = vadd.xlane.f32.xlu0 %v505
    %v537 = vpop.xlane.xlu0 %536
    %538 = vadd.xlane.f32.xlu0 %v507
    %v539 = vpop.xlane.xlu0 %538
    %540 = vadd.xlane.f32.xlu0 %v509
    %v541 = vpop.xlane.xlu0 %540
    %542 = vadd.xlane.f32.xlu0 %v511
    %v543 = vpop.xlane.xlu0 %542
    %544 = vadd.xlane.f32.xlu0 %v513
    %v545 = vpop.xlane.xlu0 %544
    %546 = vadd.xlane.f32.xlu0 %v515
    %v547 = vpop.xlane.xlu0 %546
    %548 = vadd.xlane.f32.xlu0 %v517
    %v549 = vpop.xlane.xlu0 %548
    %550 = vadd.xlane.f32.xlu0 %v519
    %v551 = vpop.xlane.xlu0 %550
    %552 = vadd.xlane.f32.xlu0 %v521
    %v553 = vpop.xlane.xlu0 %552
    %554 = vadd.xlane.f32.xlu0 %v523
    %v555 = vpop.xlane.xlu0 %554
    %556 = vadd.xlane.f32.xlu0 %v525
    %v557 = vpop.xlane.xlu0 %556
    %558 = vadd.xlane.f32.xlu0 %v527
    %v559 = vpop.xlane.xlu0 %558
    %v560 = vlog2.pop %v529
    %v561 = vmul.f32 %v560, 0.6931472
    %v562 = vlog2.pop %v531
    %v563 = vmul.f32 %v562, 0.6931472
    %v564 = vlog2.pop %v533
    %v565 = vmul.f32 %v564, 0.6931472
    %v566 = vlog2.pop %v535
    %v567 = vmul.f32 %v566, 0.6931472
    %v568 = vlog2.pop %v537
    %v569 = vmul.f32 %v568, 0.6931472
    %v570 = vlog2.pop %v539
    %v571 = vmul.f32 %v570, 0.6931472
    %v572 = vlog2.pop %v541
    %v573 = vmul.f32 %v572, 0.6931472
    %v574 = vlog2.pop %v543
    %v575 = vmul.f32 %v574, 0.6931472
    %v576 = vlog2.pop %v545
    %v577 = vmul.f32 %v576, 0.6931472
    %v578 = vlog2.pop %v547
    %v579 = vmul.f32 %v578, 0.6931472
    %v580 = vlog2.pop %v549
    %v581 = vmul.f32 %v580, 0.6931472
    %v582 = vlog2.pop %v551
    %v583 = vmul.f32 %v582, 0.6931472
    %v584 = vlog2.pop %v553
    %v585 = vmul.f32 %v584, 0.6931472
    %v586 = vlog2.pop %v555
    %v587 = vmul.f32 %v586, 0.6931472
    %v588 = vlog2.pop %v557
    %v589 = vmul.f32 %v588, 0.6931472
    %v590 = vlog2.pop %v559
    %v591 = vmul.f32 %v590, 0.6931472
    %v592 = vsub.f32 %v480, %v561
    %v593 = vsub.f32 %v481, %v563
    %v594 = vsub.f32 %v482, %v565
    %v595 = vsub.f32 %v483, %v567
    %v596 = vsub.f32 %v484, %v569
    %v597 = vsub.f32 %v485, %v571
    %v598 = vsub.f32 %v486, %v573
    %v599 = vsub.f32 %v487, %v575
    %v600 = vsub.f32 %v488, %v577
    %v601 = vsub.f32 %v489, %v579
    %v602 = vsub.f32 %v490, %v581
    %v603 = vsub.f32 %v491, %v583
    %v604 = vsub.f32 %v492, %v585
    %v605 = vsub.f32 %v493, %v587
    %v606 = vsub.f32 %v494, %v589
    %v607 = vsub.f32 %v495, %v591
    %608 = vst [vmem:[#allocation2] sm:$0xff] %v592
    %609 = vst [vmem:[#allocation2 + $0x8] sm:$0xff] %v593
    %610 = vst [vmem:[#allocation2 + $0x10] sm:$0xff] %v594
    %611 = vst [vmem:[#allocation2 + $0x18] sm:$0xff] %v595
    %612 = vst [vmem:[#allocation2 + $0x20] sm:$0xff] %v596
    %613 = vst [vmem:[#allocation2 + $0x28] sm:$0xff] %v597
    %614 = vst [vmem:[#allocation2 + $0x30] sm:$0xff] %v598
    %615 = vst [vmem:[#allocation2 + $0x38] sm:$0xff] %v599
    %616 = vst [vmem:[#allocation2 + $0x40] sm:$0xff] %v600
    %617 = vst [vmem:[#allocation2 + $0x48] sm:$0xff] %v601
    %618 = vst [vmem:[#allocation2 + $0x50] sm:$0xff] %v602
    %619 = vst [vmem:[#allocation2 + $0x58] sm:$0xff] %v603
    %620 = vst [vmem:[#allocation2 + $0x60] sm:$0xff] %v604
    %621 = vst [vmem:[#allocation2 + $0x68] sm:$0xff] %v605
    %622 = vst [vmem:[#allocation2 + $0x70] sm:$0xff] %v606
    %623 = vst [vmem:[#allocation2 + $0x78] sm:$0xff] %v607
    // Predicated region
    $region26: #{tpu_custom_call.1} parent=1 // pred_check
      _
    $region27: #{tpu_custom_call.1} parent=1 // pred_check_branch
      %625 = sbr.rel (0) target = $region29
    $region28: #{tpu_custom_call.1} parent=1 // pred_region
      %627 = vsyncadd [#allocation3], 0
      %s628 = sshll.u32 [#allocation2], 4
      %s629 = int_to_ptr.vmem [resolvable:$true] %s628
      %s630 = sshll.u32 %s6, 4
      %s631 = int_to_ptr.hbm [resolvable:$true] %s630
      %636 = dma.vmem_to_hbm [thread:$0]  %s629, 2048, %s631, [#allocation3], 128, 128, 8
    $region29: #{tpu_custom_call.1} parent=1 // pred_fallthru
      _
    // Predicated region
    $region30: #{tpu_custom_call.1} parent=1 // pred_check
      _
    $region31: #{tpu_custom_call.1} parent=1 // pred_check_branch
      %638 = sbr.rel (0) target = $region33
    $region32: #{tpu_custom_call.1} parent=1 // pred_region
      %640 = dma.done [#allocation3], 2048
    $region33: #{tpu_custom_call.1} parent=1 // pred_fallthru
      _
    %641 = vsyncpa [#allocation3], 1

</llo_original>
